<compile_context>
chip_gen: v7x
topology: tpu7x:2x2x1
jax: 0.10.0
libtpu: 0.0.40
codegen_flags: <defaults>
</compile_context>

<pallas_src>
import jax
import jax.numpy as jnp
from jax.experimental import pallas as pl
from jax.experimental.pallas import tpu as pltpu


def _add_pos_embed_kernel(emb_ref, x_ref, o_ref):
    # emb_ref: (H, W*C) — resident across grid steps (constant block index).
    # x_ref / o_ref: (TB, H, W*C) — one batch chunk.
    o_ref[...] = x_ref[...] + emb_ref[...]


def add_broadcast_pos_embed(x, emb0, emb1, *, tile_bytes=2 << 20):
    """x: (B, H, W, C) channels-last; emb0: (H, C//2); emb1: (W, C//2)."""
    B, H, W, C = x.shape
    assert C % 2 == 0, "embd_dim must be divisible by n_dim"
    assert emb0.shape == (H, C // 2)
    assert emb1.shape == (W, C // 2)

    # --- Precompute the positional-embedding slab once (tiny: H*W*C elems),
    #     in x.dtype, and flatten to lane-dense (H, W*C). ---------------------
    e0 = jnp.broadcast_to(emb0[:, None, :], (H, W, C // 2))
    e1 = jnp.broadcast_to(emb1[None, :, :], (H, W, C // 2))
    emb2d = jnp.concatenate([e0, e1], axis=-1).astype(x.dtype).reshape(H, W * C)

    # --- Lane-dense view of x (free reshape for contiguous channels-last). ---
    x3d = x.reshape(B, H, W * C)

    # --- Batch-tile sizing: keep each block under `tile_bytes` (fits the
    #     double-buffered pipeline well inside every generation's scoped VMEM)
    #     but keep at least 2 parallel grid steps to feed both v7x TCs. -------
    bytes_per_image = H * W * C * jnp.dtype(x.dtype).itemsize
    tb = max(1, min(B, tile_bytes // max(bytes_per_image, 1)))
    if B >= 2:
        tb = min(tb, (B + 1) // 2)
    while B % tb != 0:          # keep blocks evenly dividing the batch
        tb -= 1
    grid_b = B // tb

    out = pl.pallas_call(
        _add_pos_embed_kernel,
        out_shape=jax.ShapeDtypeStruct((B, H, W * C), x.dtype),
        grid_spec=pltpu.PrefetchScalarGridSpec(
            num_scalar_prefetch=0,
            grid=(grid_b,),
            in_specs=[
                # emb slab: constant block index -> resident in VMEM.
                pl.BlockSpec((H, W * C), lambda b: (0, 0)),
                pl.BlockSpec((tb, H, W * C), lambda b: (b, 0, 0)),
            ],
            out_specs=pl.BlockSpec((tb, H, W * C), lambda b: (b, 0, 0)),
        ),
        compiler_params=pltpu.CompilerParams(
            dimension_semantics=("parallel",),
            vmem_limit_bytes=32 * 1024 * 1024,
        ),
    )(emb2d, x3d)

    return out.reshape(B, H, W, C)


def reference(x, emb0, emb1):
    B, H, W, C = x.shape
    c_half = C // 2
    e0 = jnp.broadcast_to(emb0[None, :, None, :], (1, H, W, c_half))
    e1 = jnp.broadcast_to(emb1[None, None, :, :], (1, H, W, c_half))
    return x + jnp.concatenate([e0, e1], axis=-1)


if __name__ == "__main__":
    # Module config: shape=(8, 16), embd_dim=32, n_dim=2, dim=-1
    shape = (8, 16)
    embd_dim = 32
    B = 2
    H, W = shape
    c_half = embd_dim // len(shape)

    key = jax.random.PRNGKey(0)
    kx, k0, k1 = jax.random.split(key, 3)

    x = jax.random.normal(kx, (B, H, W, embd_dim), dtype=jnp.float32)
    # trunc_normal_(mean=0, std=0.02): deterministic synthetic init
    emb0 = 0.02 * jax.random.truncated_normal(
        k0, -2.0, 2.0, (H, c_half), dtype=jnp.float32)
    emb1 = 0.02 * jax.random.truncated_normal(
        k1, -2.0, 2.0, (W, c_half), dtype=jnp.float32)

    out = add_broadcast_pos_embed(x, emb0, emb1)
    out = jax.block_until_ready(out)

    ref = reference(x, emb0, emb1)
    assert out.shape == (B, H, W, embd_dim)
    assert jnp.allclose(out, ref, atol=1e-6, rtol=1e-6)

    print("KERNEL_OK")
</pallas_src>

<mosaic_0001>
module attributes {stable_mosaic.version = 11 : i64} {
  func.func @_add_pos_embed_kernel(%arg0: i32, %arg1: memref<8x512xf32, #tpu.memory_space<vmem>>, %arg2: memref<1x8x512xf32, #tpu.memory_space<vmem>>, %arg3: memref<1x8x512xf32, #tpu.memory_space<vmem>>) attributes {dimension_semantics = [#tpu.dimension_semantics<parallel>], iteration_bounds = array<i64: 2>, scalar_prefetch = 0 : i64, scratch_operands = 0 : i64, tpu.core_type = #tpu.core_type<tc>, window_params = [{pipeline_mode = #tpu.pipeline_mode<synchronous>, transform_indices = @transform_0, window_bounds = array<i64: 8, 512>}, {transform_indices = @transform_1, window_bounds = array<i64: 1, 8, 512>}, {transform_indices = @transform_2, window_bounds = array<i64: 1, 8, 512>}]} {
    %c0 = arith.constant 0 : index
    %c0_0 = arith.constant 0 : index
    %c0_1 = arith.constant 0 : index
    %0 = vector.load %arg2[%c0, %c0_0, %c0_1] : memref<1x8x512xf32, #tpu.memory_space<vmem>>, vector<1x8x512xf32>
    %c0_2 = arith.constant 0 : index
    %c0_3 = arith.constant 0 : index
    %1 = vector.load %arg1[%c0_2, %c0_3] : memref<8x512xf32, #tpu.memory_space<vmem>>, vector<8x512xf32>
    %2 = vector.shape_cast %1 : vector<8x512xf32> to vector<1x8x512xf32>
    %3 = arith.addf %0, %2 : vector<1x8x512xf32>
    %c0_4 = arith.constant 0 : index
    %c0_5 = arith.constant 0 : index
    %c0_6 = arith.constant 0 : index
    %4 = vector.load %arg3[%c0_4, %c0_5, %c0_6] : memref<1x8x512xf32, #tpu.memory_space<vmem>>, vector<1x8x512xf32>
    tpu.vector_store %arg3[%c0_4, %c0_5, %c0_6], %3 {strides = array<i32>} : memref<1x8x512xf32, #tpu.memory_space<vmem>>, vector<1x8x512xf32>,
    return
  }
  func.func @transform_0(%arg0: i32) -> (i32, i32) {
    %c0_i32 = arith.constant 0 : i32
    %c0_i32_0 = arith.constant 0 : i32
    %c0_i32_1 = arith.constant 0 : i32
    return %c0_i32, %c0_i32_0 : i32, i32
  }
  func.func @transform_1(%arg0: i32) -> (i32, i32, i32) {
    %c0_i32 = arith.constant 0 : i32
    %c0_i32_0 = arith.constant 0 : i32
    %c0_i32_1 = arith.constant 0 : i32
    return %arg0, %c0_i32, %c0_i32_0 : i32, i32, i32
  }
  func.func @transform_2(%arg0: i32) -> (i32, i32, i32) {
    %c0_i32 = arith.constant 0 : i32
    %c0_i32_0 = arith.constant 0 : i32
    %c0_i32_1 = arith.constant 0 : i32
    return %arg0, %c0_i32, %c0_i32_0 : i32, i32, i32
  }
}

</mosaic_0001>

<llo_original>
// kernel: tpu_custom_call.1
$region0: #{tpu_custom_call.1}
  #allocation0 [shape = 'u32[]', space=smem, size = 0x4, offset = 0x4, fixed_abs, tag = 'smem constant byte address 0x4 - core index']
  #allocation1 [shape = 'u32[144,128]{1,0:T(1,128)}', space=vmem, size = 0x12000, scoped, tag = 'internal scratch']
  %s0 = inlined_call_operand.hbm [shape: f32[8,512], index: 0, kind: input, shape index: {}]
  %s1 = inlined_call_operand.hbm [shape: f32[2,8,512], index: 1, kind: input, shape index: {}]
  %s2 = inlined_call_operand.hbm [shape: f32[2,8,512], index: 2, kind: output, shape index: {}]
  %s3 = sld [smem:[#allocation0]]
  $region49: #{tpu_custom_call.1} parent=0
    _
  %s5 = ssub.s32 1, %s3
  %s6 = scalar_select 0, %s5, %s3
  $region1: #{tpu_custom_call.1} parent=0
    #allocation2 [shape = 'u8[16384]{0}', space=vmem, size = 0x4000, scoped, tag = 'input window, operand 0, single buffered']
    #allocation3 [shape = 's32[2]{0}', space=sflag, size = 0x8, scoped, tag = 'scoped memory for tpu_custom_call.1']
    #allocation4 [shape = 's32[2]{0}', space=sflag, size = 0x8, scoped, tag = 'scoped memory for tpu_custom_call.1']
    #allocation5 [shape = 'u8[32768]{0}', space=vmem, size = 0x8000, scoped, tag = 'input window, operand 1']
    #allocation6 [shape = 's32[2]{0}', space=sflag, size = 0x8, scoped, tag = 'scoped memory for tpu_custom_call.1']
    #allocation7 [shape = 'u8[32768]{0}', space=vmem, size = 0x8000, scoped, tag = 'output window, operand 0']
    %7 = vsyncpa [#allocation3], 0
    %8 = vsyncpa [#allocation6], 0
    %s9 = scalar_lea.sflag [#allocation6], 1
    %10 = vsyncpa %s9, 0
    %11 = vsyncpa [#allocation4], 0
    %s12 = scalar_lea.sflag [#allocation4], 1
    %13 = vsyncpa %s12, 0
    loop: start=0, step=1, limit=4
    $region2: #{tpu_custom_call.1} parent=1 // loop_pre_header
      _
    $region3: #{tpu_custom_call.1} parent=1 // loop_header
      %s15 = sphi 0, %s19
      %p16 = scmp.ge.s32.totalorder %s15, 4
      %s23 = sphi 0, %s23
      %s25 = sphi 0, %s23
      %s26 = sphi 0, %s25
      %s40 = sphi 0, %s26
      %s46 = sphi 0, %s48
      %s49 = sphi 0, %s46
      %s50 = sphi 0, %s49
      %s66 = sphi 0, %s50
      %s72 = sphi 0, %s74
      %s75 = sphi 0, %s72
      %s76 = sphi 0, %s75
      %s92 = sphi 0, %s76
    $region4: #{tpu_custom_call.1} parent=1 // loop_header_branch
      %18 = sbr.rel (%p16) target = $region8
    $region5: #{tpu_custom_call.1} parent=1 // loop_body
      %s20 = ssub.s32 %s15, 1
      %s21 = ssub.s32 %s15, 2
      %s22 = sadd.s32 %s15, 1
      %s24 = sadd.s32 %s23, 1
      %p27 = scmp.eq.s32.totalorder %s15, 1
      %p28 = scmp.ne.s32.totalorder %s23, %s25
      %p29 = scmp.eq.s32.totalorder %s15, 0
      %p30 = por %p28, %p29
      %p31 = scmp.ne.s32.totalorder %s23, %s25
      %p32 = scmp.eq.s32.totalorder %s20, 1
      %p33 = por %p31, %p32
      %p34 = scmp.ne.s32.totalorder %s25, %s26
      %p35 = scmp.eq.s32.totalorder %s20, 0
      %p36 = por %p34, %p35
      %p37 = scmp.ne.s32.totalorder %s25, %s26
      %p38 = scmp.eq.s32.totalorder %s21, 1
      %p39 = por %p37, %p38
      %p41 = scmp.ne.s32.totalorder %s26, %s40
      %p42 = scmp.eq.s32.totalorder %s21, 0
      %p43 = por %p41, %p42
      %s44 = ssub.s32 %s15, %s22
      %p45 = scmp.eq.s32.totalorder %s44, 0
      %s47 = sadd.s32 %s46, 1
      %s48 = scalar_select %p45, %s46, %s47
      %p51 = pneg %p45
      %p52 = scmp.eq.s32.totalorder %s15, 1
      %p53 = por %p51, %p52
      %p54 = scmp.ne.s32.totalorder %s46, %s49
      %p55 = scmp.eq.s32.totalorder %s15, 0
      %p56 = por %p54, %p55
      %p57 = scmp.ne.s32.totalorder %s46, %s49
      %p58 = scmp.eq.s32.totalorder %s20, 1
      %p59 = por %p57, %p58
      %p60 = scmp.ne.s32.totalorder %s49, %s50
      %p61 = scmp.eq.s32.totalorder %s20, 0
      %p62 = por %p60, %p61
      %p63 = scmp.ne.s32.totalorder %s49, %s50
      %p64 = scmp.eq.s32.totalorder %s21, 1
      %p65 = por %p63, %p64
      %p67 = scmp.ne.s32.totalorder %s50, %s66
      %p68 = scmp.eq.s32.totalorder %s21, 0
      %p69 = por %p67, %p68
      %s70 = ssub.s32 %s15, %s22
      %p71 = scmp.eq.s32.totalorder %s70, 0
      %s73 = sadd.s32 %s72, 1
      %s74 = scalar_select %p71, %s72, %s73
      %p77 = pneg %p71
      %p78 = scmp.eq.s32.totalorder %s15, 1
      %p79 = por %p77, %p78
      %p80 = scmp.ne.s32.totalorder %s72, %s75
      %p81 = scmp.eq.s32.totalorder %s15, 0
      %p82 = por %p80, %p81
      %p83 = scmp.ne.s32.totalorder %s72, %s75
      %p84 = scmp.eq.s32.totalorder %s20, 1
      %p85 = por %p83, %p84
      %p86 = scmp.ne.s32.totalorder %s75, %s76
      %p87 = scmp.eq.s32.totalorder %s20, 0
      %p88 = por %p86, %p87
      %p89 = scmp.ne.s32.totalorder %s75, %s76
      %p90 = scmp.eq.s32.totalorder %s21, 1
      %p91 = por %p89, %p90
      %p93 = scmp.ne.s32.totalorder %s76, %s92
      %p94 = scmp.eq.s32.totalorder %s21, 0
      %p95 = por %p93, %p94
      %p96 = scmp.le.s32.totalorder 1, %s15
      %p97 = scmp.lt.s32.totalorder %s15, 3
      %p98 = pnand %p96, %p97
      %p99 = pneg %p98
      // Predicated region
      $region9: #{tpu_custom_call.1} parent=5 // pred_check
        _
      $region10: #{tpu_custom_call.1} parent=5 // pred_check_branch
        %101 = sbr.rel (%p98) target = $region12
      $region11: #{tpu_custom_call.1} parent=5 // pred_region
        %s102 = ssub.s32 %s15, 1
        // Predicated region
        $region13: #{tpu_custom_call.1} parent=11 // pred_check
          %p103 = pneg %p36
        $region14: #{tpu_custom_call.1} parent=11 // pred_check_branch
          %105 = sbr.rel (%p103) target = $region16
        $region15: #{tpu_custom_call.1} parent=11 // pred_region
          %s107 = ssub.s32 512, 512
          %108 = vsyncadd [#allocation3], %s107
          %s110 = sshll.u32 [#allocation2], 4
          %s111 = int_to_ptr.vmem [resolvable:$true] %s110
          %113 = dma.hbm_to_vmem [thread:$0]  %s0, 512, %s111, [#allocation3]
        $region16: #{tpu_custom_call.1} parent=11 // pred_fallthru
          _
      $region12: #{tpu_custom_call.1} parent=5 // pred_fallthru
        _
      %p114 = scmp.lt.s32.totalorder %s15, 2
      // Predicated region
      $region17: #{tpu_custom_call.1} parent=5 // pred_check
        %p115 = pneg %p114
      $region18: #{tpu_custom_call.1} parent=5 // pred_check_branch
        %117 = sbr.rel (%p115) target = $region20
      $region19: #{tpu_custom_call.1} parent=5 // pred_region
        // Predicated region
        $region21: #{tpu_custom_call.1} parent=19 // pred_check
          %p118 = pneg %p56
        $region22: #{tpu_custom_call.1} parent=19 // pred_check_branch
          %120 = sbr.rel (%p118) target = $region24
        $region23: #{tpu_custom_call.1} parent=19 // pred_region
          %s121 = sand.u32 %s46, 1
          %s122 = scalar_lea.sflag [#allocation6], %s121
          %s123 = sand.u32 %s46, 1
          %s124 = smul.addr %s123, 32
          %s125 = scalar_lea.vmem [#allocation5], %s124
          %s127 = ssub.s32 512, 512
          %128 = vsyncadd %s122, %s127
          %s129 = smul.addr %s15, 4
          %s130 = smul.addr %s129, 128
          %s131 = scalar_lea.hbm %s1, %s130
          %s133 = sshll.u32 %s125, 4
          %s134 = int_to_ptr.vmem [resolvable:$true] %s133
          %136 = dma.hbm_to_vmem [thread:$0]  %s131, 512, %s134, %s122
        $region24: #{tpu_custom_call.1} parent=19 // pred_fallthru
          _
      $region20: #{tpu_custom_call.1} parent=5 // pred_fallthru
        _
      %p137 = scmp.le.s32.totalorder 1, %s15
      %p138 = scmp.lt.s32.totalorder %s15, 3
      %p139 = pnand %p137, %p138
      %p140 = pneg %p139
      // Predicated region
      $region25: #{tpu_custom_call.1} parent=5 // pred_check
        _
      $region26: #{tpu_custom_call.1} parent=5 // pred_check_branch
        %142 = sbr.rel (%p139) target = $region28
      $region27: #{tpu_custom_call.1} parent=5 // pred_region
        %s143 = ssub.s32 %s15, 1
        // Predicated region
        $region29: #{tpu_custom_call.1} parent=27 // pred_check
          %p144 = pneg %p36
        $region30: #{tpu_custom_call.1} parent=27 // pred_check_branch
          %146 = sbr.rel (%p144) target = $region32
        $region31: #{tpu_custom_call.1} parent=27 // pred_region
          %147 = dma.done [#allocation3], 512
        $region32: #{tpu_custom_call.1} parent=27 // pred_fallthru
          _
        %s148 = sand.u32 %s49, 1
        %s149 = scalar_lea.sflag [#allocation6], %s148
        %s150 = sand.u32 %s49, 1
        %s151 = smul.addr %s150, 32
        %s152 = scalar_lea.vmem [#allocation5], %s151
        // Predicated region
        $region33: #{tpu_custom_call.1} parent=27 // pred_check
          %p153 = pneg %p62
        $region34: #{tpu_custom_call.1} parent=27 // pred_check_branch
          %155 = sbr.rel (%p153) target = $region36
        $region35: #{tpu_custom_call.1} parent=27 // pred_region
          %156 = dma.done %s149, 512
        $region36: #{tpu_custom_call.1} parent=27 // pred_fallthru
          _
        %p157 = pneg %p36
        %p158 = pneg %p33
        %s159 = sand.u32 %s49, 1
        %s160 = scalar_lea.sflag [#allocation6], %s159
        %s161 = sand.u32 %s49, 1
        %s162 = smul.addr %s161, 32
        %s163 = scalar_lea.vmem [#allocation5], %s162
        %p164 = pneg %p62
        %p165 = pneg %p59
        %p166 = pneg %p88
        %p167 = pneg %p85
        %s168 = sand.u32 %s75, 1
        %s169 = scalar_lea.sflag [#allocation4], %s168
        %s170 = sand.u32 %s75, 1
        %s171 = smul.addr %s170, 32
        %s172 = scalar_lea.vmem [#allocation7], %s171
        %v173 = vld [vmem:[%s152] sm:$0xff]
        %v174 = vld [vmem:[%s152 + $0x8] sm:$0xff]
        %v175 = vld [vmem:[%s152 + $0x10] sm:$0xff]
        %v176 = vld [vmem:[%s152 + $0x18] sm:$0xff]
        %v177 = vld [vmem:[#allocation2] sm:$0xff]
        %v178 = vld [vmem:[#allocation2 + $0x8] sm:$0xff]
        %v179 = vld [vmem:[#allocation2 + $0x10] sm:$0xff]
        %v180 = vld [vmem:[#allocation2 + $0x18] sm:$0xff]
        %v181 = vadd.f32 %v173, %v177
        %v182 = vadd.f32 %v174, %v178
        %v183 = vadd.f32 %v175, %v179
        %v184 = vadd.f32 %v176, %v180
        %185 = vst [vmem:[%s172] sm:$0xff] %v181
        %186 = vst [vmem:[%s172 + $0x8] sm:$0xff] %v182
        %187 = vst [vmem:[%s172 + $0x10] sm:$0xff] %v183
        %188 = vst [vmem:[%s172 + $0x18] sm:$0xff] %v184
        %s189 = sand.u32 %s75, 1
        %s190 = scalar_lea.sflag [#allocation4], %s189
        %s191 = sand.u32 %s75, 1
        %s192 = smul.addr %s191, 32
        %s193 = scalar_lea.vmem [#allocation7], %s192
        // Predicated region
        $region37: #{tpu_custom_call.1} parent=27 // pred_check
          %p194 = pneg %p85
        $region38: #{tpu_custom_call.1} parent=27 // pred_check_branch
          %196 = sbr.rel (%p194) target = $region40
        $region39: #{tpu_custom_call.1} parent=27 // pred_region
          %s198 = ssub.s32 512, 512
          %199 = vsyncadd %s190, %s198
          %s200 = smul.addr %s20, 4
          %s201 = smul.addr %s200, 128
          %s202 = scalar_lea.hbm %s2, %s201
          %s204 = sshll.u32 %s193, 4
          %s205 = int_to_ptr.vmem [resolvable:$true] %s204
          %207 = dma.vmem_to_hbm [thread:$0]  %s205, 512, %s202, %s190
        $region40: #{tpu_custom_call.1} parent=27 // pred_fallthru
          _
      $region28: #{tpu_custom_call.1} parent=5 // pred_fallthru
        _
      %p208 = scmp.le.s32.totalorder 2, %s15
      // Predicated region
      $region41: #{tpu_custom_call.1} parent=5 // pred_check
        %p209 = pneg %p208
      $region42: #{tpu_custom_call.1} parent=5 // pred_check_branch
        %211 = sbr.rel (%p209) target = $region44
      $region43: #{tpu_custom_call.1} parent=5 // pred_region
        %s212 = ssub.s32 %s15, 2
        // Predicated region
        $region45: #{tpu_custom_call.1} parent=43 // pred_check
          %p213 = pneg %p91
        $region46: #{tpu_custom_call.1} parent=43 // pred_check_branch
          %215 = sbr.rel (%p213) target = $region48
        $region47: #{tpu_custom_call.1} parent=43 // pred_region
          %s216 = sand.u32 %s76, 1
          %s217 = scalar_lea.sflag [#allocation4], %s216
          %s218 = sand.u32 %s76, 1
          %s219 = smul.addr %s218, 32
          %s220 = scalar_lea.vmem [#allocation7], %s219
          %221 = dma.done %s217, 512
        $region48: #{tpu_custom_call.1} parent=43 // pred_fallthru
          _
      $region44: #{tpu_custom_call.1} parent=5 // pred_fallthru
        _
    $region6: #{tpu_custom_call.1} parent=1 // loop_footer
      %s19 = sadd.s32 1, %s15
    $region7: #{tpu_custom_call.1} parent=1 // loop_footer_branch
      %14 = sbr.rel target = $region3
    $region8: #{tpu_custom_call.1} parent=1 // loop_exit
      _
    %222 = vsyncpa [#allocation3], 1
    %s223 = scalar_lea.sflag [#allocation3], 1
    %224 = vsyncpa %s223, 1
    %225 = vsyncpa [#allocation6], 1
    %s226 = scalar_lea.sflag [#allocation6], 1
    %227 = vsyncpa %s226, 1
    %228 = vsyncpa [#allocation4], 1
    %s229 = scalar_lea.sflag [#allocation4], 1
    %230 = vsyncpa %s229, 1

</llo_original>
